<compile_context>
chip_gen: v6e
topology: v6e:2x2x1
jax: 0.10.0
libtpu: 0.0.40
codegen_flags: <defaults>
</compile_context>

<pallas_src>
import jax
import jax.numpy as jnp
from jax.experimental import pallas as pl
from jax.experimental.pallas import tpu as pltpu


def _ceil_div(a, b):
    return (a + b - 1) // b


def _round_up(a, m):
    return _ceil_div(a, m) * m


def patch_tokens_kernel(patches_ref, w_ref, posb_ref, out_ref):
    """One grid step == one (sample, row-tile) of patch tokens.

    patches_ref : (tm, K)  bf16 unfolded image patches (leading batch dim squeezed)
    w_ref       : (E, K)   bf16 conv weight, untransposed (contract on axis 1)
    posb_ref    : (tm, E)  f32 pos_embed[:, 1:, :] tile with the conv bias folded in
    out_ref     : (tm, E)  output patch tokens for this tile
    """
    acc = jax.lax.dot_general(
        patches_ref[...], w_ref[...],
        dimension_numbers=(((1,), (1,)), ((), ())),   # [tm,K] x [E,K]^T -> [tm,E]
        preferred_element_type=jnp.float32)
    out_ref[...] = (acc + posb_ref[...]).astype(out_ref.dtype)


def patch_generator_forward(imgs, w_conv, b_conv, cls_token, pos_embed, patch_size,
                            out_dtype=jnp.float32):
    """Forward pass of PatchGenerator with to_mask=False.

    imgs      : [N, C, H, W]  (NCHW, like the PyTorch module)
    w_conv    : [E, C, p, p]  Conv2d weight (kernel == stride == patch_size)
    b_conv    : [E]           Conv2d bias
    cls_token : [1, 1, E]
    pos_embed : [1, L+1, E]
    returns   : [N, L+1, E]   (cls token first)
    """
    N, C, H, W = imgs.shape
    p = patch_size
    Hp, Wp = H // p, W // p
    L = Hp * Wp
    E = w_conv.shape[0]
    K = C * p * p

    # Unfold NCHW into per-patch feature vectors ordered (c, ph, pw): exactly
    # Conv2d(kernel=stride=p) followed by flatten(2).transpose(1, 2).
    patches = (imgs.reshape(N, C, Hp, p, Wp, p)
                   .transpose(0, 2, 4, 1, 3, 5)
                   .reshape(N, L, K))

    # Row-tile sizing: up to 256 patch rows per tile, 16-row (bf16 sublane) aligned.
    num_l_tiles = _ceil_div(L, 256)
    tm = _round_up(_ceil_div(L, num_l_tiles), 16)
    L_pad = tm * num_l_tiles

    # bf16 streamed operands (f32 accumulation inside the kernel).
    patches_bf = patches.astype(jnp.bfloat16)
    if L_pad != L:
        patches_bf = jnp.pad(patches_bf, ((0, 0), (0, L_pad - L), (0, 0)))
    w_mat = w_conv.reshape(E, K).astype(jnp.bfloat16)      # untransposed [E, K]

    # Fold conv bias into the per-patch positional embedding (kept f32).
    pos_plus_bias = (pos_embed[0, 1:, :] + b_conv[None, :]).astype(jnp.float32)
    if L_pad != L:
        pos_plus_bias = jnp.pad(pos_plus_bias, ((0, L_pad - L), (0, 0)))

    tokens = pl.pallas_call(
        patch_tokens_kernel,
        out_shape=jax.ShapeDtypeStruct((N, L_pad, E), out_dtype),
        grid=(N, num_l_tiles),
        in_specs=[
            pl.BlockSpec((pl.Squeezed(), tm, K), lambda n, l: (n, l, 0)),
            pl.BlockSpec((E, K), lambda n, l: (0, 0)),
            pl.BlockSpec((tm, E), lambda n, l: (l, 0)),
        ],
        out_specs=pl.BlockSpec((pl.Squeezed(), tm, E), lambda n, l: (n, l, 0)),
        compiler_params=pltpu.CompilerParams(
            dimension_semantics=("parallel", "parallel"),
            vmem_limit_bytes=32 * 1024 * 1024,
        ),
    )(patches_bf, w_mat, pos_plus_bias)

    # Batch-invariant cls row, computed once and broadcast in the wrapper
    # (keeps every kernel store aligned instead of an offset-1 masked store).
    cls_row = (cls_token.reshape(1, E) + pos_embed[0, :1, :]).astype(out_dtype)
    cls_rows = jnp.broadcast_to(cls_row[None, :, :], (N, 1, E))

    # TODO(synk): random_masking (to_mask=True path) needs per-sample random argsort +
    # gather; it stays in host-side JAX and is not implemented in this kernel.
    return jnp.concatenate([cls_rows, tokens[:, :L, :]], axis=1)


if __name__ == "__main__":
    # Small, forward-consistent shapes.
    img_size, patch_size, in_channels, embed_dims = 16, 4, 4, 32
    N = 2
    num_patches = (img_size // patch_size) ** 2  # 16

    key = jax.random.PRNGKey(0)
    k1, k2, k3, k4, k5 = jax.random.split(key, 5)
    imgs = jax.random.normal(k1, (N, in_channels, img_size, img_size), jnp.float32)
    # Deterministic synthetic parameters (shapes from the module's __init__ / PatchEmbed).
    w_conv = 0.02 * jax.random.normal(
        k2, (embed_dims, in_channels, patch_size, patch_size), jnp.float32)
    b_conv = 0.02 * jax.random.normal(k3, (embed_dims,), jnp.float32)
    cls_token = 0.02 * jax.random.normal(k4, (1, 1, embed_dims), jnp.float32)
    pos_embed = 0.02 * jax.random.normal(
        k5, (1, num_patches + 1, embed_dims), jnp.float32)

    out = patch_generator_forward(imgs, w_conv, b_conv, cls_token, pos_embed, patch_size)
    out = jax.block_until_ready(out)

    # Pure-JAX f32 reference (mirrors the PyTorch forward with to_mask=False).
    ref_tok = jax.lax.conv_general_dilated(
        imgs, w_conv, window_strides=(patch_size, patch_size), padding="VALID",
        dimension_numbers=("NCHW", "OIHW", "NCHW"))
    ref_tok = ref_tok + b_conv[None, :, None, None]
    ref_tok = ref_tok.reshape(N, embed_dims, -1).transpose(0, 2, 1)  # [N, L, E]
    ref_tok = ref_tok + pos_embed[:, 1:, :]
    cls_row = cls_token + pos_embed[:, :1, :]
    ref = jnp.concatenate(
        [jnp.broadcast_to(cls_row, (N, 1, embed_dims)), ref_tok], axis=1)

    assert out.shape == (N, num_patches + 1, embed_dims), out.shape
    # bf16 matmul operands (f32 accumulation) -> loosened tolerance vs f32 reference.
    assert jnp.allclose(out, ref, atol=1e-2, rtol=1e-2), float(
        jnp.max(jnp.abs(out - ref)))
    print("KERNEL_OK")
</pallas_src>

<mosaic_0001>
module attributes {stable_mosaic.version = 11 : i64} {
  func.func @patch_tokens_kernel(%arg0: i32, %arg1: i32, %arg2: memref<1x16x64xbf16, #tpu.memory_space<vmem>>, %arg3: memref<32x64xbf16, #tpu.memory_space<vmem>>, %arg4: memref<16x32xf32, #tpu.memory_space<vmem>>, %arg5: memref<1x16x32xf32, #tpu.memory_space<vmem>>) attributes {dimension_semantics = [#tpu.dimension_semantics<parallel>, #tpu.dimension_semantics<parallel>], iteration_bounds = array<i64: 2, 1>, scalar_prefetch = 0 : i64, scratch_operands = 0 : i64, tpu.core_type = #tpu.core_type<tc>, window_params = [{transform_indices = @transform_0, window_bounds = array<i64: 1, 16, 64>}, {pipeline_mode = #tpu.pipeline_mode<synchronous>, transform_indices = @transform_1, window_bounds = array<i64: 32, 64>}, {transform_indices = @transform_2, window_bounds = array<i64: 16, 32>}, {transform_indices = @transform_3, window_bounds = array<i64: 1, 16, 32>}]} {
    %c0 = arith.constant 0 : index
    %c0_0 = arith.constant 0 : index
    %c0_1 = arith.constant 0 : index
    %0 = vector.load %arg2[%c0, %c0_0, %c0_1] : memref<1x16x64xbf16, #tpu.memory_space<vmem>>, vector<1x16x64xbf16>
    %1 = vector.shape_cast %0 : vector<1x16x64xbf16> to vector<16x64xbf16>
    %c0_2 = arith.constant 0 : index
    %c0_3 = arith.constant 0 : index
    %2 = vector.load %arg3[%c0_2, %c0_3] : memref<32x64xbf16, #tpu.memory_space<vmem>>, vector<32x64xbf16>
    %cst = arith.constant dense<0.000000e+00> : vector<16x32xf32>
    %3 = tpu.matmul %1, %2, %cst {dimension_numbers = #tpu.dot_dimension_numbers<[1], [1], [0], [0], [0, 0, 1, 0], [], []>} : vector<16x64xbf16>, vector<32x64xbf16>, vector<16x32xf32> -> vector<16x32xf32>
    %c0_4 = arith.constant 0 : index
    %c0_5 = arith.constant 0 : index
    %4 = vector.load %arg4[%c0_4, %c0_5] : memref<16x32xf32, #tpu.memory_space<vmem>>, vector<16x32xf32>
    %5 = arith.addf %3, %4 : vector<16x32xf32>
    %c0_6 = arith.constant 0 : index
    %c0_7 = arith.constant 0 : index
    %c0_8 = arith.constant 0 : index
    %6 = vector.load %arg5[%c0_6, %c0_7, %c0_8] : memref<1x16x32xf32, #tpu.memory_space<vmem>>, vector<1x16x32xf32>
    %7 = vector.shape_cast %6 : vector<1x16x32xf32> to vector<16x32xf32>
    %8 = vector.shape_cast %5 : vector<16x32xf32> to vector<1x16x32xf32>
    tpu.vector_store %arg5[%c0_6, %c0_7, %c0_8], %8 {strides = array<i32>} : memref<1x16x32xf32, #tpu.memory_space<vmem>>, vector<1x16x32xf32>,
    return
  }
  func.func @transform_0(%arg0: i32, %arg1: i32) -> (i32, i32, i32) {
    %c0_i32 = arith.constant 0 : i32
    %c0_i32_0 = arith.constant 0 : i32
    return %arg0, %arg1, %c0_i32 : i32, i32, i32
  }
  func.func @transform_1(%arg0: i32, %arg1: i32) -> (i32, i32) {
    %c0_i32 = arith.constant 0 : i32
    %c0_i32_0 = arith.constant 0 : i32
    %c0_i32_1 = arith.constant 0 : i32
    return %c0_i32, %c0_i32_0 : i32, i32
  }
  func.func @transform_2(%arg0: i32, %arg1: i32) -> (i32, i32) {
    %c0_i32 = arith.constant 0 : i32
    %c0_i32_0 = arith.constant 0 : i32
    return %arg1, %c0_i32 : i32, i32
  }
  func.func @transform_3(%arg0: i32, %arg1: i32) -> (i32, i32, i32) {
    %c0_i32 = arith.constant 0 : i32
    %c0_i32_0 = arith.constant 0 : i32
    return %arg0, %arg1, %c0_i32 : i32, i32, i32
  }
}

</mosaic_0001>

<llo_original>
// kernel: tpu_custom_call.1
$region0: #{tpu_custom_call.1}
  #allocation0 [shape = 'u32[]', space=smem, size = 0x4, offset = 0x4, fixed_abs, tag = 'smem constant byte address 0x4 - core index']
  #allocation1 [shape = 'u32[144,128]{1,0:T(1,128)}', space=vmem, size = 0x12000, scoped, tag = 'internal scratch']
  %s0 = inlined_call_operand.hbm [shape: bf16[2,16,64], index: 0, kind: input, shape index: {}]
  %s1 = inlined_call_operand.hbm [shape: bf16[32,64], index: 1, kind: input, shape index: {}]
  %s2 = inlined_call_operand.hbm [shape: f32[16,32], index: 2, kind: input, shape index: {}]
  %s3 = inlined_call_operand.hbm [shape: f32[2,16,32], index: 3, kind: output, shape index: {}]
  %s4 = sld [smem:[#allocation0]]
  $region57: #{tpu_custom_call.1} parent=0
    _
  %s6 = ssub.s32 1, %s4
  %s7 = scalar_select 0, %s6, %s4
  $region1: #{tpu_custom_call.1} parent=0
    #allocation2 [shape = 'u8[8192]{0}', space=vmem, size = 0x2000, scoped, tag = 'input window, operand 0']
    #allocation3 [shape = 's32[2]{0}', space=sflag, size = 0x8, scoped, tag = 'scoped memory for tpu_custom_call.1']
    #allocation4 [shape = 's32[2]{0}', space=sflag, size = 0x8, scoped, tag = 'scoped memory for tpu_custom_call.1']
    #allocation5 [shape = 'u8[8192]{0}', space=vmem, size = 0x2000, scoped, tag = 'input window, operand 1, single buffered']
    #allocation6 [shape = 's32[1]{0}', space=sflag, size = 0x4, scoped, tag = 'scoped memory for tpu_custom_call.1']
    #allocation7 [shape = 'u8[8192]{0}', space=vmem, size = 0x2000, scoped, tag = 'input window, operand 2, single buffered']
    #allocation8 [shape = 'u8[16384]{0}', space=vmem, size = 0x4000, scoped, tag = 'output window, operand 0']
    %8 = vsyncpa [#allocation3], 0
    %s9 = scalar_lea.sflag [#allocation3], 1
    %10 = vsyncpa %s9, 0
    %11 = vsyncpa [#allocation6], 0
    %12 = vsyncpa [#allocation4], 0
    %s13 = scalar_lea.sflag [#allocation4], 1
    %14 = vsyncpa %s13, 0
    loop: start=0, step=1, limit=4
    $region2: #{tpu_custom_call.1} parent=1 // loop_pre_header
      _
    $region3: #{tpu_custom_call.1} parent=1 // loop_header
      %s16 = sphi 0, %s20
      %p17 = scmp.ge.s32.totalorder %s16, 4
      %s23 = sphi 0, %s35
      %s24 = sphi 0, %s31
      %s25 = sphi 0, %s23
      %s26 = sphi 0, %s24
      %s27 = sphi 0, %s25
      %s28 = sphi 0, %s26
      %s40 = sphi 0, %s42
      %s43 = sphi 0, %s40
      %s44 = sphi 0, %s43
      %s60 = sphi 0, %s44
      %s64 = sphi 0, %s64
      %s66 = sphi 0, %s64
      %s67 = sphi 0, %s66
      %s81 = sphi 0, %s67
      %s87 = sphi 0, %s89
      %s90 = sphi 0, %s87
      %s91 = sphi 0, %s90
      %s107 = sphi 0, %s91
      %s115 = sphi 0, %s117
      %s118 = sphi 0, %s115
      %s119 = sphi 0, %s118
      %s135 = sphi 0, %s119
    $region4: #{tpu_custom_call.1} parent=1 // loop_header_branch
      %19 = sbr.rel (%p17) target = $region8
    $region5: #{tpu_custom_call.1} parent=1 // loop_body
      %s21 = ssub.s32 %s16, 1
      %s22 = ssub.s32 %s16, 2
      %s29 = sadd.s32 1, %s24
      %p30 = scmp.ge.s32.totalorder %s29, 1
      %s31 = scalar_select %p30, 0, %s29
      %s32 = sadd.s32 1, %s23
      %s33 = scalar_select %p30, %s32, %s23
      %p34 = scmp.ge.s32.totalorder %s33, 2
      %s35 = scalar_select %p34, 0, %s33
      %s36 = ssub.s32 %s23, %s35
      %s37 = ssub.s32 %s24, %s31
      %s38 = sor.u32 %s36, %s37
      %p39 = scmp.eq.s32.totalorder %s38, 0
      %s41 = sadd.s32 %s40, 1
      %s42 = scalar_select %p39, %s40, %s41
      %p45 = pneg %p39
      %p46 = scmp.eq.s32.totalorder %s16, 1
      %p47 = por %p45, %p46
      %p48 = scmp.ne.s32.totalorder %s40, %s43
      %p49 = scmp.eq.s32.totalorder %s16, 0
      %p50 = por %p48, %p49
      %p51 = scmp.ne.s32.totalorder %s40, %s43
      %p52 = scmp.eq.s32.totalorder %s21, 1
      %p53 = por %p51, %p52
      %p54 = scmp.ne.s32.totalorder %s43, %s44
      %p55 = scmp.eq.s32.totalorder %s21, 0
      %p56 = por %p54, %p55
      %p57 = scmp.ne.s32.totalorder %s43, %s44
      %p58 = scmp.eq.s32.totalorder %s22, 1
      %p59 = por %p57, %p58
      %p61 = scmp.ne.s32.totalorder %s44, %s60
      %p62 = scmp.eq.s32.totalorder %s22, 0
      %p63 = por %p61, %p62
      %s65 = sadd.s32 %s64, 1
      %p68 = scmp.eq.s32.totalorder %s16, 1
      %p69 = scmp.ne.s32.totalorder %s64, %s66
      %p70 = scmp.eq.s32.totalorder %s16, 0
      %p71 = por %p69, %p70
      %p72 = scmp.ne.s32.totalorder %s64, %s66
      %p73 = scmp.eq.s32.totalorder %s21, 1
      %p74 = por %p72, %p73
      %p75 = scmp.ne.s32.totalorder %s66, %s67
      %p76 = scmp.eq.s32.totalorder %s21, 0
      %p77 = por %p75, %p76
      %p78 = scmp.ne.s32.totalorder %s66, %s67
      %p79 = scmp.eq.s32.totalorder %s22, 1
      %p80 = por %p78, %p79
      %p82 = scmp.ne.s32.totalorder %s67, %s81
      %p83 = scmp.eq.s32.totalorder %s22, 0
      %p84 = por %p82, %p83
      %s85 = ssub.s32 %s24, %s31
      %p86 = scmp.eq.s32.totalorder %s85, 0
      %s88 = sadd.s32 %s87, 1
      %s89 = scalar_select %p86, %s87, %s88
      %p92 = pneg %p86
      %p93 = scmp.eq.s32.totalorder %s16, 1
      %p94 = por %p92, %p93
      %p95 = scmp.ne.s32.totalorder %s87, %s90
      %p96 = scmp.eq.s32.totalorder %s16, 0
      %p97 = por %p95, %p96
      %p98 = scmp.ne.s32.totalorder %s87, %s90
      %p99 = scmp.eq.s32.totalorder %s21, 1
      %p100 = por %p98, %p99
      %p101 = scmp.ne.s32.totalorder %s90, %s91
      %p102 = scmp.eq.s32.totalorder %s21, 0
      %p103 = por %p101, %p102
      %p104 = scmp.ne.s32.totalorder %s90, %s91
      %p105 = scmp.eq.s32.totalorder %s22, 1
      %p106 = por %p104, %p105
      %p108 = scmp.ne.s32.totalorder %s91, %s107
      %p109 = scmp.eq.s32.totalorder %s22, 0
      %p110 = por %p108, %p109
      %s111 = ssub.s32 %s23, %s35
      %s112 = ssub.s32 %s24, %s31
      %s113 = sor.u32 %s111, %s112
      %p114 = scmp.eq.s32.totalorder %s113, 0
      %s116 = sadd.s32 %s115, 1
      %s117 = scalar_select %p114, %s115, %s116
      %p120 = pneg %p114
      %p121 = scmp.eq.s32.totalorder %s16, 1
      %p122 = por %p120, %p121
      %p123 = scmp.ne.s32.totalorder %s115, %s118
      %p124 = scmp.eq.s32.totalorder %s16, 0
      %p125 = por %p123, %p124
      %p126 = scmp.ne.s32.totalorder %s115, %s118
      %p127 = scmp.eq.s32.totalorder %s21, 1
      %p128 = por %p126, %p127
      %p129 = scmp.ne.s32.totalorder %s118, %s119
      %p130 = scmp.eq.s32.totalorder %s21, 0
      %p131 = por %p129, %p130
      %p132 = scmp.ne.s32.totalorder %s118, %s119
      %p133 = scmp.eq.s32.totalorder %s22, 1
      %p134 = por %p132, %p133
      %p136 = scmp.ne.s32.totalorder %s119, %s135
      %p137 = scmp.eq.s32.totalorder %s22, 0
      %p138 = por %p136, %p137
      %p139 = scmp.le.s32.totalorder 1, %s16
      %p140 = scmp.lt.s32.totalorder %s16, 3
      %p141 = pnand %p139, %p140
      %p142 = pneg %p141
      // Predicated region
      $region9: #{tpu_custom_call.1} parent=5 // pred_check
        _
      $region10: #{tpu_custom_call.1} parent=5 // pred_check_branch
        %144 = sbr.rel (%p141) target = $region12
      $region11: #{tpu_custom_call.1} parent=5 // pred_region
        %s145 = ssub.s32 %s16, 1
        // Predicated region
        $region13: #{tpu_custom_call.1} parent=11 // pred_check
          %p146 = pneg %p77
        $region14: #{tpu_custom_call.1} parent=11 // pred_check_branch
          %148 = sbr.rel (%p146) target = $region16
        $region15: #{tpu_custom_call.1} parent=11 // pred_region
          %s150 = ssub.s32 256, 256
          %151 = vsyncadd [#allocation6], %s150
          %s152 = sshll.u32 [#allocation5], 4
          %s153 = int_to_ptr.vmem [resolvable:$true] %s152
          %158 = dma.hbm_to_vmem [thread:$0]  %s1, 256, %s153, [#allocation6], 64, 64, 4
        $region16: #{tpu_custom_call.1} parent=11 // pred_fallthru
          _
        // Predicated region
        $region17: #{tpu_custom_call.1} parent=11 // pred_check
          %p159 = pneg %p103
        $region18: #{tpu_custom_call.1} parent=11 // pred_check_branch
          %161 = sbr.rel (%p159) target = $region20
        $region19: #{tpu_custom_call.1} parent=11 // pred_region
          %s162 = smul.u32 2, %s26
          %s164 = ssub.s32 256, 256
          %165 = vsyncadd [#allocation6], %s164
          %s166 = smul.addr %s162, 128
          %s167 = scalar_lea.hbm %s2, %s166
          %s168 = sshll.u32 [#allocation7], 4
          %s169 = int_to_ptr.vmem [resolvable:$true] %s168
          %174 = dma.hbm_to_vmem [thread:$0]  %s167, 256, %s169, [#allocation6], 128, 128, 8
        $region20: #{tpu_custom_call.1} parent=11 // pred_fallthru
          _
      $region12: #{tpu_custom_call.1} parent=5 // pred_fallthru
        _
      %p175 = scmp.lt.s32.totalorder %s16, 2
      // Predicated region
      $region21: #{tpu_custom_call.1} parent=5 // pred_check
        %p176 = pneg %p175
      $region22: #{tpu_custom_call.1} parent=5 // pred_check_branch
        %178 = sbr.rel (%p176) target = $region24
      $region23: #{tpu_custom_call.1} parent=5 // pred_region
        // Predicated region
        $region25: #{tpu_custom_call.1} parent=23 // pred_check
          %p179 = pneg %p50
        $region26: #{tpu_custom_call.1} parent=23 // pred_check_branch
          %181 = sbr.rel (%p179) target = $region28
        $region27: #{tpu_custom_call.1} parent=23 // pred_region
          %s182 = sand.u32 %s40, 1
          %s183 = scalar_lea.sflag [#allocation3], %s182
          %s184 = sand.u32 %s40, 1
          %s185 = smul.addr %s184, 8
          %s186 = scalar_lea.vmem [#allocation2], %s185
          %s187 = smul.u32 2, %s24
          %s189 = ssub.s32 128, 128
          %190 = vsyncadd %s183, %s189
          %s191 = smul.addr %s23, 2
          %s192 = sadd.s32 %s187, %s191
          %s193 = smul.addr %s192, 64
          %s194 = scalar_lea.hbm %s0, %s193
          %s195 = sshll.u32 %s186, 4
          %s196 = int_to_ptr.vmem [resolvable:$true] %s195
          %201 = dma.hbm_to_vmem [thread:$0]  %s194, 128, %s196, %s183, 64, 64, 4
        $region28: #{tpu_custom_call.1} parent=23 // pred_fallthru
          _
      $region24: #{tpu_custom_call.1} parent=5 // pred_fallthru
        _
      %p202 = scmp.le.s32.totalorder 1, %s16
      %p203 = scmp.lt.s32.totalorder %s16, 3
      %p204 = pnand %p202, %p203
      %p205 = pneg %p204
      // Predicated region
      $region29: #{tpu_custom_call.1} parent=5 // pred_check
        _
      $region30: #{tpu_custom_call.1} parent=5 // pred_check_branch
        %207 = sbr.rel (%p204) target = $region32
      $region31: #{tpu_custom_call.1} parent=5 // pred_region
        %s208 = ssub.s32 %s16, 1
        %s209 = sand.u32 %s43, 1
        %s210 = scalar_lea.sflag [#allocation3], %s209
        %s211 = sand.u32 %s43, 1
        %s212 = smul.addr %s211, 8
        %s213 = scalar_lea.vmem [#allocation2], %s212
        // Predicated region
        $region33: #{tpu_custom_call.1} parent=31 // pred_check
          %p214 = pneg %p56
        $region34: #{tpu_custom_call.1} parent=31 // pred_check_branch
          %216 = sbr.rel (%p214) target = $region36
        $region35: #{tpu_custom_call.1} parent=31 // pred_region
          %217 = dma.done %s210, 128
        $region36: #{tpu_custom_call.1} parent=31 // pred_fallthru
          _
        // Predicated region
        $region37: #{tpu_custom_call.1} parent=31 // pred_check
          %p218 = pneg %p77
        $region38: #{tpu_custom_call.1} parent=31 // pred_check_branch
          %220 = sbr.rel (%p218) target = $region40
        $region39: #{tpu_custom_call.1} parent=31 // pred_region
          %221 = dma.done [#allocation6], 256
        $region40: #{tpu_custom_call.1} parent=31 // pred_fallthru
          _
        // Predicated region
        $region41: #{tpu_custom_call.1} parent=31 // pred_check
          %p222 = pneg %p103
        $region42: #{tpu_custom_call.1} parent=31 // pred_check_branch
          %224 = sbr.rel (%p222) target = $region44
        $region43: #{tpu_custom_call.1} parent=31 // pred_region
          %225 = dma.done [#allocation6], 256
        $region44: #{tpu_custom_call.1} parent=31 // pred_fallthru
          _
        %s226 = sand.u32 %s43, 1
        %s227 = scalar_lea.sflag [#allocation3], %s226
        %s228 = sand.u32 %s43, 1
        %s229 = smul.addr %s228, 8
        %s230 = scalar_lea.vmem [#allocation2], %s229
        %p231 = pneg %p56
        %p232 = pneg %p53
        %p233 = pneg %p77
        %p234 = pneg %p74
        %p235 = pneg %p103
        %p236 = pneg %p100
        %p237 = pneg %p131
        %p238 = pneg %p128
        %s239 = sand.u32 %s118, 1
        %s240 = scalar_lea.sflag [#allocation4], %s239
        %s241 = sand.u32 %s118, 1
        %s242 = smul.addr %s241, 16
        %s243 = scalar_lea.vmem [#allocation8], %s242
        %s244 = smul.u32 2, %s26
        %s245 = smul.u32 2, %s26
        %s246 = smul.u32 2, %s26
        %v248 = vld [vmem:[%s213] sm:$0xf]
        %v249 = vld [vmem:[%s213 + $0x4] sm:$0xf]
        %v250 = vld [vmem:[#allocation5] sm:$0xf]
        %v251 = vld [vmem:[#allocation5 + $0x4] sm:$0xf]
        %v252 = vld [vmem:[#allocation5 + $0x8] sm:$0xf]
        %v253 = vld [vmem:[#allocation5 + $0xc] sm:$0xf]
        %v254 = vld [vmem:[#allocation7] sm:$0xff]
        %v255 = vld [vmem:[#allocation7 + $0x8] sm:$0xff]
        %v258 = vunpack.c.l.b16 %v248
        %v259 = vunpack.c.l.b16 %v249
        %v260 = vpack.c.b16 %v259, %v258
        %v265 = vunpack.c.l.b16 %v250
        %v266 = vunpack.c.l.b16 %v251
        %v267 = vunpack.c.l.b16 %v252
        %v268 = vunpack.c.l.b16 %v253
        %v269 = vpack.c.b16 %v266, %v265
        %v270 = vpack.c.b16 %v268, %v267
        %vm271 = vcmask 523264
        %v273 = vsel %vm271, %v260, 0
        %v276 = vsel %vm271, %v269, 0
        %v279 = vsel %vm271, %v270, 0
        %281 = vmatprep.subr.bf16.mxu0 0
        %282 = vmatpush1.bf16.xpose.msra.mxu0 0
        %283 = vmatprep.subr.bf16.mxu0 0
        %284 = vmatpush1.bf16.xpose.msra.mxu0 0
        %285 = vmatprep.subr.bf16.mxu0 0
        %286 = vmatpush1.bf16.xpose.msra.mxu0 0
        %287 = vmatprep.subr.bf16.mxu0 0
        %288 = vmatpush1.bf16.xpose.msra.mxu0 0
        %289 = vmatprep.subr.bf16.mxu0 0
        %290 = vmatpush1.bf16.xpose.msra.mxu0 0
        %291 = vmatprep.subr.bf16.mxu0 0
        %292 = vmatpush1.bf16.xpose.msra.mxu0 0
        %293 = vmatprep.subr.bf16.mxu0 0
        %294 = vmatpush1.bf16.xpose.msra.mxu0 %v279
        %295 = vmatprep.subr.bf16.mxu0 0
        %296 = vmatpush1.bf16.xpose.msra.mxu0 %v276
        %297 = vmatprep.subr.bf16.mxu0 0
        %298 = vmatpush2.bf16.xpose.msra.mxu0 0
        %299 = vmatprep.subr.bf16.mxu0 0
        %300 = vmatpush2.bf16.xpose.msra.mxu0 0
        %301 = vmatprep.subr.bf16.mxu0 0
        %302 = vmatpush2.bf16.xpose.msra.mxu0 0
        %303 = vmatprep.subr.bf16.mxu0 0
        %304 = vmatpush2.bf16.xpose.msra.mxu0 0
        %305 = vmatprep.subr.bf16.mxu0 0
        %306 = vmatpush2.bf16.xpose.msra.mxu0 0
        %307 = vmatprep.subr.bf16.mxu0 0
        %308 = vmatpush2.bf16.xpose.msra.mxu0 0
        %309 = vmatprep.subr.bf16.mxu0 0
        %310 = vmatpush2.bf16.xpose.msra.mxu0 0
        %311 = vmatprep.subr.bf16.mxu0 0
        %312 = vmatpush2.bf16.xpose.msra.mxu0 0
        %313 = vmatprep.mubr.bf16.mxu0 0
        %314 = vmatmul.mubr.bf16.gmra.mxu0 %v273
        %v315 = vpop.f32.mrf.mxu0
        %v316 = vadd.f32 %v254, %v315
        %v317 = vpop.f32.mrf.mxu0
        %v318 = vpop.f32.mrf.mxu0
        %v319 = vadd.f32 %v255, %v318
        %v320 = vpop.f32.mrf.mxu0
        %321 = vdwg.mxu0
        %vm322 = vcmask 261120
        %323 = vst.msk [vmem:[%s243] sm:$0xff] %vm322, %v316
        %324 = vst.msk [vmem:[%s243 + $0x8] sm:$0xff] %vm322, %v319
        %s325 = sand.u32 %s118, 1
        %s326 = scalar_lea.sflag [#allocation4], %s325
        %s327 = sand.u32 %s118, 1
        %s328 = smul.addr %s327, 16
        %s329 = scalar_lea.vmem [#allocation8], %s328
        // Predicated region
        $region45: #{tpu_custom_call.1} parent=31 // pred_check
          %p330 = pneg %p128
        $region46: #{tpu_custom_call.1} parent=31 // pred_check_branch
          %332 = sbr.rel (%p330) target = $region48
        $region47: #{tpu_custom_call.1} parent=31 // pred_region
          %s333 = smul.u32 2, %s26
          %s335 = ssub.s32 256, 256
          %336 = vsyncadd %s326, %s335
          %s337 = smul.addr %s25, 2
          %s338 = sadd.s32 %s333, %s337
          %s339 = smul.addr %s338, 128
          %s340 = scalar_lea.hbm %s3, %s339
          %s341 = sshll.u32 %s329, 4
          %s342 = int_to_ptr.vmem [resolvable:$true] %s341
          %347 = dma.vmem_to_hbm [thread:$0]  %s342, 256, %s340, %s326, 128, 128, 8
        $region48: #{tpu_custom_call.1} parent=31 // pred_fallthru
          _
      $region32: #{tpu_custom_call.1} parent=5 // pred_fallthru
        _
      %p348 = scmp.le.s32.totalorder 2, %s16
      // Predicated region
      $region49: #{tpu_custom_call.1} parent=5 // pred_check
        %p349 = pneg %p348
      $region50: #{tpu_custom_call.1} parent=5 // pred_check_branch
        %351 = sbr.rel (%p349) target = $region52
      $region51: #{tpu_custom_call.1} parent=5 // pred_region
        %s352 = ssub.s32 %s16, 2
        // Predicated region
        $region53: #{tpu_custom_call.1} parent=51 // pred_check
          %p353 = pneg %p134
        $region54: #{tpu_custom_call.1} parent=51 // pred_check_branch
          %355 = sbr.rel (%p353) target = $region56
        $region55: #{tpu_custom_call.1} parent=51 // pred_region
          %s356 = sand.u32 %s119, 1
          %s357 = scalar_lea.sflag [#allocation4], %s356
          %s358 = sand.u32 %s119, 1
          %s359 = smul.addr %s358, 16
          %s360 = scalar_lea.vmem [#allocation8], %s359
          %361 = dma.done %s357, 256
        $region56: #{tpu_custom_call.1} parent=51 // pred_fallthru
          _
      $region52: #{tpu_custom_call.1} parent=5 // pred_fallthru
        _
    $region6: #{tpu_custom_call.1} parent=1 // loop_footer
      %s20 = sadd.s32 1, %s16
    $region7: #{tpu_custom_call.1} parent=1 // loop_footer_branch
      %15 = sbr.rel target = $region3
    $region8: #{tpu_custom_call.1} parent=1 // loop_exit
      _
    %362 = vsyncpa [#allocation3], 1
    %s363 = scalar_lea.sflag [#allocation3], 1
    %364 = vsyncpa %s363, 1
    %365 = vsyncpa [#allocation6], 1
    %366 = vsyncpa [#allocation4], 1
    %s367 = scalar_lea.sflag [#allocation4], 1
    %368 = vsyncpa %s367, 1

</llo_original>
